<compile_context>
chip_gen: v7x
topology: tpu7x:2x2x1
jax: 0.10.0
libtpu: 0.0.40
codegen_flags: <defaults>
</compile_context>

<pallas_src>
import functools

import jax
import jax.numpy as jnp
import numpy as np
from jax.experimental import pallas as pl
from jax.experimental.pallas import tpu as pltpu


def _round_up(a: int, b: int) -> int:
    return ((a + b - 1) // b) * b


# ----------------------------------------------------------------------------
# Pallas kernel: (tile_n, tile_k) @ (tile_k, E_pad) accumulated in f32 scratch;
# bias / optional LayerNorm applied on the last K step, then stored lane-dense.
# ----------------------------------------------------------------------------
def _patch_proj_kernel(x_ref, w_ref, b_ref, g_ref, bt_ref, o_ref, acc_ref, *,
                       apply_norm: bool, eps: float, nk: int,
                       e_real: int, e_pad: int):
    k = pl.program_id(1)

    @pl.when(k == 0)
    def _init():
        acc_ref[...] = jnp.zeros_like(acc_ref)

    # bf16 x bf16 -> f32 on the MXU.
    acc_ref[...] += jnp.dot(x_ref[...], w_ref[...],
                            preferred_element_type=jnp.float32)

    @pl.when(k == nk - 1)
    def _finalize():
        acc = acc_ref[...] + b_ref[...]          # bias broadcast, (1, E_pad)
        if apply_norm:
            # LayerNorm over the *real* embed_dim (padded lanes are zero after
            # the bias add but must be excluded from mean/var).
            if e_real == e_pad:
                mean = jnp.mean(acc, axis=-1, keepdims=True)
                cen = acc - mean
                var = jnp.mean(cen * cen, axis=-1, keepdims=True)
            else:
                col = jax.lax.broadcasted_iota(jnp.int32, acc.shape, 1)
                mask = col < e_real
                inv_e = 1.0 / float(e_real)
                mean = jnp.sum(jnp.where(mask, acc, 0.0), axis=-1,
                               keepdims=True) * inv_e
                cen = acc - mean
                var = jnp.sum(jnp.where(mask, cen * cen, 0.0), axis=-1,
                              keepdims=True) * inv_e
            acc = cen * jax.lax.rsqrt(var + eps)      # rsqrt -> EUP slot
            acc = acc * g_ref[...] + bt_ref[...]      # padded lanes -> 0
        o_ref[...] = acc.astype(o_ref.dtype)


def _pick_tile_n(n_rows: int, tile_k: int, e_pad: int,
                 max_tile: int = 512,
                 budget_bytes: int = 12 * 1024 * 1024) -> int:
    """Largest tile_n (multiple of 8, <= max_tile) that fits the VMEM budget."""
    # per-row: bf16 patch tile (double-buffered) + f32 acc + f32 out (dbuf)
    per_row = 4 * tile_k + 12 * e_pad
    # fixed: bf16 weight slab (double-buffered) + bias/gamma/beta
    fixed = 4 * tile_k * e_pad + 3 * 4 * e_pad
    tile = (budget_bytes - fixed) // max(per_row, 1)
    tile = min(max_tile, tile, _round_up(n_rows, 8))
    tile = (tile // 8) * 8
    return max(tile, 8)


# ----------------------------------------------------------------------------
# Wrapper: padding + patchify glue in plain JAX, projection in Pallas.
# ----------------------------------------------------------------------------
def patch_embed_3d(x, weight, bias, patch_size,
                   gamma=None, beta=None, eps=1e-5, max_tile_n=512):
    """Forward of PatchEmbed3D.

    x:      (B, C, L, H, W)        float32  (PyTorch NCDHW layout)
    weight: (E, C, pL, pH, pW)     Conv3d weight
    bias:   (E,)                   Conv3d bias
    gamma/beta: (E,) or None       optional LayerNorm affine params
    returns (B, E, L', H', W')
    """
    B, C, L, H, W = x.shape
    pl_sz, ph_sz, pw_sz = patch_size
    E = weight.shape[0]

    # --- replicate the reference padding computation exactly ----------------
    padding_left = padding_right = padding_top = padding_bottom = 0
    padding_front = padding_back = 0
    l_remainder = L % pl_sz
    h_remainder = H % pl_sz   # NOTE: reference uses l_patch_size here (bug-compatible)
    w_remainder = W % pw_sz
    if l_remainder:
        l_pad = pl_sz - l_remainder
        padding_front = l_pad // 2
        padding_back = l_pad - padding_front
    if h_remainder:
        h_pad = ph_sz - h_remainder
        padding_top = h_pad // 2
        padding_bottom = h_pad - padding_top
    if w_remainder:
        w_pad = pw_sz - w_remainder
        padding_left = w_pad // 2
        padding_right = w_pad - padding_left

    # Cast to bf16 before any layout work: halves HBM traffic of the glue and
    # of the patch-tile DMAs; accumulation stays f32 in the kernel.
    x = x.astype(jnp.bfloat16)
    x = jnp.pad(x, ((0, 0), (0, 0),
                    (padding_front, padding_back),
                    (padding_top, padding_bottom),
                    (padding_left, padding_right)))
    _, _, Lp, Hp, Wp = x.shape
    nL, nH, nW = Lp // pl_sz, Hp // ph_sz, Wp // pw_sz

    # --- patchify (pure layout glue) -----------------------------------------
    # (B, C, nL, pL, nH, pH, nW, pW) -> (B, nL, nH, nW, C, pL, pH, pW)
    patches = x.reshape(B, C, nL, pl_sz, nH, ph_sz, nW, pw_sz)
    patches = patches.transpose(0, 2, 4, 6, 1, 3, 5, 7)
    K = C * pl_sz * ph_sz * pw_sz
    N = B * nL * nH * nW
    patches = patches.reshape(N, K)                       # bf16

    # Conv3d weight (E, C, pL, pH, pW) -> (K, E), same flatten order.
    w2 = weight.reshape(E, K).T.astype(jnp.bfloat16)
    b2 = bias.reshape(1, E).astype(jnp.float32)

    apply_norm = gamma is not None
    if gamma is None:
        gamma = jnp.ones((E,), jnp.float32)
        beta = jnp.zeros((E,), jnp.float32)
    g2 = gamma.reshape(1, E).astype(jnp.float32)
    bt2 = beta.reshape(1, E).astype(jnp.float32)

    # --- lane-pad embed_dim to a multiple of 128 (unmasked, lane-dense stores)
    E_pad = _round_up(E, 128)
    if E_pad != E:
        w2 = jnp.pad(w2, ((0, 0), (0, E_pad - E)))
        b2 = jnp.pad(b2, ((0, 0), (0, E_pad - E)))
        g2 = jnp.pad(g2, ((0, 0), (0, E_pad - E)))
        bt2 = jnp.pad(bt2, ((0, 0), (0, E_pad - E)))

    # --- K tiling: keep full K resident when small, split otherwise ----------
    if K <= 1024:
        tile_k, K_pad = K, K
    else:
        tile_k = 512
        K_pad = _round_up(K, tile_k)
        patches = jnp.pad(patches, ((0, 0), (0, K_pad - K)))
        w2 = jnp.pad(w2, ((0, K_pad - K), (0, 0)))
    nk = K_pad // tile_k

    # --- row tiling: big tiles, sized to the VMEM budget ---------------------
    tile_n = _pick_tile_n(N, tile_k, E_pad, max_tile=max_tile_n)
    N_pad = _round_up(N, tile_n)
    if N_pad != N:
        patches = jnp.pad(patches, ((0, N_pad - N), (0, 0)))

    kernel = functools.partial(_patch_proj_kernel,
                               apply_norm=apply_norm, eps=float(eps),
                               nk=nk, e_real=E, e_pad=E_pad)

    out_flat = pl.pallas_call(
        kernel,
        out_shape=jax.ShapeDtypeStruct((N_pad, E_pad), jnp.float32),
        grid_spec=pltpu.PrefetchScalarGridSpec(
            num_scalar_prefetch=0,
            grid=(N_pad // tile_n, nk),
            in_specs=[
                pl.BlockSpec((tile_n, tile_k), lambda i, k: (i, k)),  # patches
                pl.BlockSpec((tile_k, E_pad), lambda i, k: (k, 0)),   # weight
                pl.BlockSpec((1, E_pad), lambda i, k: (0, 0)),        # bias
                pl.BlockSpec((1, E_pad), lambda i, k: (0, 0)),        # gamma
                pl.BlockSpec((1, E_pad), lambda i, k: (0, 0)),        # beta
            ],
            out_specs=pl.BlockSpec((tile_n, E_pad), lambda i, k: (i, 0)),
            scratch_shapes=[pltpu.VMEM((tile_n, E_pad), jnp.float32)],
        ),
        compiler_params=pltpu.CompilerParams(
            dimension_semantics=("parallel", "arbitrary")),
    )(patches, w2, b2, g2, bt2)

    out = out_flat[:N, :E].reshape(B, nL, nH, nW, E)
    # back to PyTorch conv output layout (B, E, L', H', W')
    return out.transpose(0, 4, 1, 2, 3)


# ----------------------------------------------------------------------------
# Pure-JAX references (same math, no Pallas) for correctness checks.
# ----------------------------------------------------------------------------
def _reference(x, weight, bias, patch_size):
    B, C, L, H, W = x.shape
    pl_sz, ph_sz, pw_sz = patch_size
    E = weight.shape[0]
    # same padding quirk as the module (H remainder uses l_patch_size)
    pf = pb = pt = pbm = pleft = pright = 0
    if L % pl_sz:
        p = pl_sz - L % pl_sz; pf = p // 2; pb = p - pf
    if H % pl_sz:
        p = ph_sz - H % pl_sz; pt = p // 2; pbm = p - pt
    if W % pw_sz:
        p = pw_sz - W % pw_sz; pleft = p // 2; pright = p - pleft
    xp = jnp.pad(x, ((0, 0), (0, 0), (pf, pb), (pt, pbm), (pleft, pright)))
    out = jax.lax.conv_general_dilated(
        xp, weight, window_strides=patch_size, padding="VALID",
        dimension_numbers=("NCDHW", "OIDHW", "NCDHW"))
    return out + bias.reshape(1, E, 1, 1, 1)


def _reference_norm(x, weight, bias, gamma, beta, patch_size, eps=1e-5):
    y = _reference(x, weight, bias, patch_size)
    yp = y.transpose(0, 2, 3, 4, 1)                 # channel-last
    mean = yp.mean(-1, keepdims=True)
    var = ((yp - mean) ** 2).mean(-1, keepdims=True)
    yn = (yp - mean) * jax.lax.rsqrt(var + eps) * gamma + beta
    return yn.transpose(0, 4, 1, 2, 3)


if __name__ == "__main__":
    # Small shapes consistent with the module (padding exercised on L and W).
    img_size = (3, 6, 10)      # (level, height, width)
    patch_size = (2, 3, 4)
    in_chans = 4
    embed_dim = 32
    B = 2

    key = jax.random.PRNGKey(0)
    kx, kw, kb, kg, kbt = jax.random.split(key, 5)
    x = jax.random.normal(kx, (B, in_chans) + img_size, dtype=jnp.float32)
    weight = jax.random.normal(
        kw, (embed_dim, in_chans) + patch_size, dtype=jnp.float32) * 0.05
    bias = jax.random.normal(kb, (embed_dim,), dtype=jnp.float32) * 0.05

    # --- norm_layer=None (module default): no LayerNorm ---------------------
    out = jax.block_until_ready(patch_embed_3d(x, weight, bias, patch_size))
    ref = jax.block_until_ready(_reference(x, weight, bias, patch_size))
    assert out.shape == ref.shape, (out.shape, ref.shape)
    # bf16 MXU inputs (f32 accumulation) -> loosened tolerance.
    np.testing.assert_allclose(np.asarray(out), np.asarray(ref),
                               rtol=2e-2, atol=2e-2)

    # --- norm_layer=nn.LayerNorm(embed_dim): masked LN over the real E ------
    gamma = 1.0 + 0.1 * jax.random.normal(kg, (embed_dim,), dtype=jnp.float32)
    beta = 0.1 * jax.random.normal(kbt, (embed_dim,), dtype=jnp.float32)
    out_n = jax.block_until_ready(
        patch_embed_3d(x, weight, bias, patch_size, gamma=gamma, beta=beta))
    ref_n = jax.block_until_ready(
        _reference_norm(x, weight, bias, gamma, beta, patch_size))
    assert out_n.shape == ref_n.shape, (out_n.shape, ref_n.shape)
    np.testing.assert_allclose(np.asarray(out_n), np.asarray(ref_n),
                               rtol=3e-2, atol=3e-2)

    print("KERNEL_OK")
</pallas_src>

<mosaic_0001>
module attributes {stable_mosaic.version = 11 : i64} {
  func.func @_patch_proj_kernel(%arg0: i32, %arg1: i32, %arg2: memref<24x96xbf16, #tpu.memory_space<vmem>>, %arg3: memref<96x128xbf16, #tpu.memory_space<vmem>>, %arg4: memref<1x128xf32, #tpu.memory_space<vmem>>, %arg5: memref<1x128xf32, #tpu.memory_space<vmem>>, %arg6: memref<1x128xf32, #tpu.memory_space<vmem>>, %arg7: memref<24x128xf32, #tpu.memory_space<vmem>>, %arg8: memref<24x128xf32, #tpu.memory_space<vmem>>) attributes {dimension_semantics = [#tpu.dimension_semantics<parallel>, #tpu.dimension_semantics<arbitrary>], iteration_bounds = array<i64: 1, 1>, scalar_prefetch = 0 : i64, scratch_operands = 1 : i64, tpu.core_type = #tpu.core_type<tc>, window_params = [{transform_indices = @transform_0, window_bounds = array<i64: 24, 96>}, {transform_indices = @transform_1, window_bounds = array<i64: 96, 128>}, {pipeline_mode = #tpu.pipeline_mode<synchronous>, transform_indices = @transform_2, window_bounds = array<i64: 1, 128>}, {pipeline_mode = #tpu.pipeline_mode<synchronous>, transform_indices = @transform_3, window_bounds = array<i64: 1, 128>}, {pipeline_mode = #tpu.pipeline_mode<synchronous>, transform_indices = @transform_4, window_bounds = array<i64: 1, 128>}, {transform_indices = @transform_5, window_bounds = array<i64: 24, 128>}]} {
    %c0_i32 = arith.constant 0 : i32
    %0 = arith.cmpi eq, %arg1, %c0_i32 : i32
    %1 = arith.extui %0 : i1 to i32
    %c0_i32_0 = arith.constant 0 : i32
    %2 = arith.cmpi ne, %1, %c0_i32_0 : i32
    scf.if %2 {
      %cst_10 = arith.constant 0.000000e+00 : f32
      %12 = vector.broadcast %cst_10 : f32 to vector<24x128xf32>
      %c0_11 = arith.constant 0 : index
      %c0_12 = arith.constant 0 : index
      %13 = vector.load %arg8[%c0_11, %c0_12] : memref<24x128xf32, #tpu.memory_space<vmem>>, vector<24x128xf32>
      tpu.vector_store %arg8[%c0_11, %c0_12], %12 {strides = array<i32>} : memref<24x128xf32, #tpu.memory_space<vmem>>, vector<24x128xf32>,
    } else {
    }
    %c0 = arith.constant 0 : index
    %c0_1 = arith.constant 0 : index
    %3 = vector.load %arg8[%c0, %c0_1] : memref<24x128xf32, #tpu.memory_space<vmem>>, vector<24x128xf32>
    %c0_2 = arith.constant 0 : index
    %c0_3 = arith.constant 0 : index
    %4 = vector.load %arg2[%c0_2, %c0_3] : memref<24x96xbf16, #tpu.memory_space<vmem>>, vector<24x96xbf16>
    %c0_4 = arith.constant 0 : index
    %c0_5 = arith.constant 0 : index
    %5 = vector.load %arg3[%c0_4, %c0_5] : memref<96x128xbf16, #tpu.memory_space<vmem>>, vector<96x128xbf16>
    %cst = arith.constant dense<0.000000e+00> : vector<24x128xf32>
    %6 = tpu.matmul %4, %5, %cst {dimension_numbers = #tpu.dot_dimension_numbers<[1], [0], [0], [1], [0, 0, 1, 1], [], []>} : vector<24x96xbf16>, vector<96x128xbf16>, vector<24x128xf32> -> vector<24x128xf32>
    %7 = arith.addf %3, %6 : vector<24x128xf32>
    %c0_6 = arith.constant 0 : index
    %c0_7 = arith.constant 0 : index
    %8 = vector.load %arg8[%c0_6, %c0_7] : memref<24x128xf32, #tpu.memory_space<vmem>>, vector<24x128xf32>
    tpu.vector_store %arg8[%c0_6, %c0_7], %7 {strides = array<i32>} : memref<24x128xf32, #tpu.memory_space<vmem>>, vector<24x128xf32>,
    %c0_i32_8 = arith.constant 0 : i32
    %9 = arith.cmpi eq, %arg1, %c0_i32_8 : i32
    %10 = arith.extui %9 : i1 to i32
    %c0_i32_9 = arith.constant 0 : i32
    %11 = arith.cmpi ne, %10, %c0_i32_9 : i32
    scf.if %11 {
      %c0_10 = arith.constant 0 : index
      %c0_11 = arith.constant 0 : index
      %12 = vector.load %arg8[%c0_10, %c0_11] : memref<24x128xf32, #tpu.memory_space<vmem>>, vector<24x128xf32>
      %c0_12 = arith.constant 0 : index
      %c0_13 = arith.constant 0 : index
      %13 = vector.load %arg4[%c0_12, %c0_13] : memref<1x128xf32, #tpu.memory_space<vmem>>, vector<1x128xf32>
      %14 = vector.broadcast %13 : vector<1x128xf32> to vector<24x128xf32>
      %15 = arith.addf %12, %14 : vector<24x128xf32>
      %c0_14 = arith.constant 0 : index
      %c0_15 = arith.constant 0 : index
      %16 = vector.load %arg7[%c0_14, %c0_15] : memref<24x128xf32, #tpu.memory_space<vmem>>, vector<24x128xf32>
      tpu.vector_store %arg7[%c0_14, %c0_15], %15 {strides = array<i32>} : memref<24x128xf32, #tpu.memory_space<vmem>>, vector<24x128xf32>,
    } else {
    }
    return
  }
  func.func @transform_0(%arg0: i32, %arg1: i32) -> (i32, i32) {
    %c0_i32 = arith.constant 0 : i32
    return %arg0, %arg1 : i32, i32
  }
  func.func @transform_1(%arg0: i32, %arg1: i32) -> (i32, i32) {
    %c0_i32 = arith.constant 0 : i32
    %c0_i32_0 = arith.constant 0 : i32
    return %arg1, %c0_i32 : i32, i32
  }
  func.func @transform_2(%arg0: i32, %arg1: i32) -> (i32, i32) {
    %c0_i32 = arith.constant 0 : i32
    %c0_i32_0 = arith.constant 0 : i32
    %c0_i32_1 = arith.constant 0 : i32
    return %c0_i32, %c0_i32_0 : i32, i32
  }
  func.func @transform_3(%arg0: i32, %arg1: i32) -> (i32, i32) {
    %c0_i32 = arith.constant 0 : i32
    %c0_i32_0 = arith.constant 0 : i32
    %c0_i32_1 = arith.constant 0 : i32
    return %c0_i32, %c0_i32_0 : i32, i32
  }
  func.func @transform_4(%arg0: i32, %arg1: i32) -> (i32, i32) {
    %c0_i32 = arith.constant 0 : i32
    %c0_i32_0 = arith.constant 0 : i32
    %c0_i32_1 = arith.constant 0 : i32
    return %c0_i32, %c0_i32_0 : i32, i32
  }
  func.func @transform_5(%arg0: i32, %arg1: i32) -> (i32, i32) {
    %c0_i32 = arith.constant 0 : i32
    %c0_i32_0 = arith.constant 0 : i32
    return %arg0, %c0_i32 : i32, i32
  }
}

</mosaic_0001>

<llo_original>
// kernel: tpu_custom_call.1
$region0: #{tpu_custom_call.1}
  #allocation0 [shape = 'u32[]', space=smem, size = 0x4, offset = 0x4, fixed_abs, tag = 'smem constant byte address 0x4 - core index']
  #allocation1 [shape = 'u32[144,128]{1,0:T(1,128)}', space=vmem, size = 0x12000, scoped, tag = 'internal scratch']
  #allocation2 [shape = 'f32[24,128]{1,0:T(8,128)}', space=vmem, size = 0x3000, scoped, tag = 'scratch operand']
  %s0 = inlined_call_operand.hbm [shape: bf16[24,96], index: 0, kind: input, shape index: {}]
  %s1 = inlined_call_operand.hbm [shape: bf16[96,128], index: 1, kind: input, shape index: {}]
  %s2 = inlined_call_operand.vmem [shape: f32[1,128], index: 2, kind: input, shape index: {}]
  %s3 = inlined_call_operand.vmem [shape: f32[1,128], index: 3, kind: input, shape index: {}]
  %s4 = inlined_call_operand.vmem [shape: f32[1,128], index: 4, kind: input, shape index: {}]
  %s5 = inlined_call_operand.hbm [shape: f32[24,128], index: 5, kind: output, shape index: {}]
  %s6 = sld [smem:[#allocation0]]
  $region46: #{tpu_custom_call.1} parent=0
    _
  %s8 = ssub.s32 1, %s6
  %s9 = scalar_select 0, %s8, %s6
  $region1: #{tpu_custom_call.1} parent=0
    #allocation3 [shape = 'u8[6144]{0}', space=vmem, size = 0x1800, scoped, tag = 'input window, operand 0, single buffered']
    #allocation4 [shape = 's32[1]{0}', space=sflag, size = 0x4, scoped, tag = 'scoped memory for tpu_custom_call.1']
    #allocation5 [shape = 's32[1]{0}', space=sflag, size = 0x4, scoped, tag = 'scoped memory for tpu_custom_call.1']
    #allocation6 [shape = 'u8[24576]{0}', space=vmem, size = 0x6000, scoped, tag = 'input window, operand 1, single buffered']
    #allocation7 [shape = 's32[1]{0}', space=sflag, size = 0x4, scoped, tag = 'scoped memory for tpu_custom_call.1']
    #allocation8 [shape = 'u8[12288]{0}', space=vmem, size = 0x3000, scoped, tag = 'output window, operand 0, single buffered']
    %10 = vsyncpa [#allocation4], 0
    %11 = vsyncpa [#allocation7], 0
    %12 = vsyncpa [#allocation5], 0
    // Predicated region
    $region2: #{tpu_custom_call.1} parent=1 // pred_check
      _
    $region3: #{tpu_custom_call.1} parent=1 // pred_check_branch
      %14 = sbr.rel (0) target = $region5
    $region4: #{tpu_custom_call.1} parent=1 // pred_region
      %s16 = ssub.s32 192, 192
      %17 = vsyncadd [#allocation4], %s16
      %s18 = sshll.u32 [#allocation3], 4
      %s19 = int_to_ptr.vmem [resolvable:$true] %s18
      %24 = dma.hbm_to_vmem [thread:$0]  %s0, 192, %s19, [#allocation4], 64, 64, 4
    $region5: #{tpu_custom_call.1} parent=1 // pred_fallthru
      _
    // Predicated region
    $region6: #{tpu_custom_call.1} parent=1 // pred_check
      _
    $region7: #{tpu_custom_call.1} parent=1 // pred_check_branch
      %26 = sbr.rel (0) target = $region9
    $region8: #{tpu_custom_call.1} parent=1 // pred_region
      %s28 = ssub.s32 768, 768
      %29 = vsyncadd [#allocation7], %s28
      %s30 = sshll.u32 [#allocation6], 4
      %s31 = int_to_ptr.vmem [resolvable:$true] %s30
      %36 = dma.hbm_to_vmem [thread:$0]  %s1, 768, %s31, [#allocation7], 64, 64, 4
    $region9: #{tpu_custom_call.1} parent=1 // pred_fallthru
      _
    // Predicated region
    $region10: #{tpu_custom_call.1} parent=1 // pred_check
      _
    $region11: #{tpu_custom_call.1} parent=1 // pred_check_branch
      %38 = sbr.rel (0) target = $region13
    $region12: #{tpu_custom_call.1} parent=1 // pred_region
      _
    $region13: #{tpu_custom_call.1} parent=1 // pred_fallthru
      _
    // Predicated region
    $region14: #{tpu_custom_call.1} parent=1 // pred_check
      _
    $region15: #{tpu_custom_call.1} parent=1 // pred_check_branch
      %40 = sbr.rel (0) target = $region17
    $region16: #{tpu_custom_call.1} parent=1 // pred_region
      _
    $region17: #{tpu_custom_call.1} parent=1 // pred_fallthru
      _
    // Predicated region
    $region18: #{tpu_custom_call.1} parent=1 // pred_check
      _
    $region19: #{tpu_custom_call.1} parent=1 // pred_check_branch
      %42 = sbr.rel (0) target = $region21
    $region20: #{tpu_custom_call.1} parent=1 // pred_region
      _
    $region21: #{tpu_custom_call.1} parent=1 // pred_fallthru
      _
    // Predicated region
    $region22: #{tpu_custom_call.1} parent=1 // pred_check
      _
    $region23: #{tpu_custom_call.1} parent=1 // pred_check_branch
      %44 = sbr.rel (0) target = $region25
    $region24: #{tpu_custom_call.1} parent=1 // pred_region
      %45 = dma.done [#allocation4], 192
    $region25: #{tpu_custom_call.1} parent=1 // pred_fallthru
      _
    // Predicated region
    $region26: #{tpu_custom_call.1} parent=1 // pred_check
      _
    $region27: #{tpu_custom_call.1} parent=1 // pred_check_branch
      %47 = sbr.rel (0) target = $region29
    $region28: #{tpu_custom_call.1} parent=1 // pred_region
      %48 = dma.done [#allocation7], 768
    $region29: #{tpu_custom_call.1} parent=1 // pred_fallthru
      _
    %p50 = scmp.eq.s32.totalorder 0, 0
    // Predicated region
    $region30: #{tpu_custom_call.1} parent=1 // pred_check
      %p51 = pneg %p50
    $region31: #{tpu_custom_call.1} parent=1 // pred_check_branch
      %53 = sbr.rel (%p51) target = $region33
    $region32: #{tpu_custom_call.1} parent=1 // pred_region
      %54 = vst [vmem:[#allocation2] sm:$0xff] 0.0
      %55 = vst [vmem:[#allocation2 + $0x8] sm:$0xff] 0.0
      %56 = vst [vmem:[#allocation2 + $0x10] sm:$0xff] 0.0
    $region33: #{tpu_custom_call.1} parent=1 // pred_fallthru
      _
    %v57 = vld [vmem:[#allocation2] sm:$0xff]
    %v58 = vld [vmem:[#allocation2 + $0x8] sm:$0xff]
    %v59 = vld [vmem:[#allocation2 + $0x10] sm:$0xff]
    %v60 = vld [vmem:[#allocation3] sm:$0xf]
    %v61 = vld [vmem:[#allocation3 + $0x4] sm:$0xf]
    %v62 = vld [vmem:[#allocation3 + $0x8] sm:$0xf]
    %v63 = vld [vmem:[#allocation6] sm:$0xf]
    %v64 = vld [vmem:[#allocation6 + $0x4] sm:$0xf]
    %v65 = vld [vmem:[#allocation6 + $0x8] sm:$0xf]
    %v66 = vld [vmem:[#allocation6 + $0xc] sm:$0xf]
    %v67 = vld [vmem:[#allocation6 + $0x10] sm:$0xf]
    %v68 = vld [vmem:[#allocation6 + $0x14] sm:$0xf]
    %v69 = vld [vmem:[#allocation6 + $0x18] sm:$0xf]
    %v70 = vld [vmem:[#allocation6 + $0x1c] sm:$0xf]
    %v71 = vld [vmem:[#allocation6 + $0x20] sm:$0xf]
    %v72 = vld [vmem:[#allocation6 + $0x24] sm:$0xf]
    %v73 = vld [vmem:[#allocation6 + $0x28] sm:$0xf]
    %v74 = vld [vmem:[#allocation6 + $0x2c] sm:$0xf]
    %v78 = vunpack.c.l.b16 %v60
    %v79 = vunpack.c.l.b16 %v61
    %v80 = vunpack.c.l.b16 %v62
    %v81 = vpack.c.b16 %v79, %v78
    %v82 = vpack.c.b16 %v80, %v80
    %v95 = vunpack.c.l.b16 %v63
    %v96 = vunpack.c.l.b16 %v64
    %v97 = vunpack.c.l.b16 %v65
    %v98 = vunpack.c.l.b16 %v66
    %v99 = vunpack.c.l.b16 %v67
    %v100 = vunpack.c.l.b16 %v68
    %v101 = vunpack.c.l.b16 %v69
    %v102 = vunpack.c.l.b16 %v70
    %v103 = vunpack.c.l.b16 %v71
    %v104 = vunpack.c.l.b16 %v72
    %v105 = vunpack.c.l.b16 %v73
    %v106 = vunpack.c.l.b16 %v74
    %v107 = vpack.c.b16 %v96, %v95
    %v108 = vpack.c.b16 %v98, %v97
    %v109 = vpack.c.b16 %v100, %v99
    %v110 = vpack.c.b16 %v102, %v101
    %v111 = vpack.c.b16 %v104, %v103
    %v112 = vpack.c.b16 %v106, %v105
    %vm119 = vcmask 785408
    %v121 = vsel %vm119, %v81, 0
    %v124 = vsel %vm119, %v82, 0
    %126 = vmatprep.subr.bf16.mxu0 0
    %127 = vmatpush1.bf16.msra.mxu0 %v107
    %128 = vmatprep.subr.bf16.mxu0 0
    %129 = vmatpush1.bf16.msra.mxu0 %v108
    %130 = vmatprep.subr.bf16.mxu0 0
    %131 = vmatpush1.bf16.msra.mxu0 %v109
    %132 = vmatprep.subr.bf16.mxu0 0
    %133 = vmatpush1.bf16.msra.mxu0 %v110
    %134 = vmatprep.subr.bf16.mxu0 0
    %135 = vmatpush1.bf16.msra.mxu0 %v111
    %136 = vmatprep.subr.bf16.mxu0 0
    %137 = vmatpush1.bf16.msra.mxu0 %v112
    %138 = vmatprep.subr.bf16.mxu0 0
    %139 = vmatpush1.bf16.msra.mxu0 0
    %140 = vmatprep.subr.bf16.mxu0 0
    %141 = vmatpush1.bf16.msra.mxu0 0
    %142 = vmatprep.subr.bf16.mxu0 0
    %143 = vmatpush1.bf16.msra.mxu0 0
    %144 = vmatprep.subr.bf16.mxu0 0
    %145 = vmatpush1.bf16.msra.mxu0 0
    %146 = vmatprep.subr.bf16.mxu0 0
    %147 = vmatpush1.bf16.msra.mxu0 0
    %148 = vmatprep.subr.bf16.mxu0 0
    %149 = vmatpush1.bf16.msra.mxu0 0
    %150 = vmatprep.subr.bf16.mxu0 0
    %151 = vmatpush1.bf16.msra.mxu0 0
    %152 = vmatprep.subr.bf16.mxu0 0
    %153 = vmatpush1.bf16.msra.mxu0 0
    %154 = vmatprep.subr.bf16.mxu0 0
    %155 = vmatpush1.bf16.msra.mxu0 0
    %156 = vmatprep.subr.bf16.mxu0 0
    %157 = vmatpush1.bf16.msra.mxu0 0
    %158 = vmatprep.mubr.bf16.mxu0 0
    %159 = vmatmul.mubr.bf16.gmra.mrb[0].mxu0 %v121
    %v160 = vpop.f32.mrb[0].mxu0
    %v161 = vadd.f32 0.0, %v160
    %v162 = vpop.f32.mrb[0].mxu0
    %v163 = vpop.f32.mrb[0].mxu0
    %v164 = vadd.f32 0.0, %v163
    %v165 = vpop.f32.mrb[0].mxu0
    %166 = vmatprep.mubr.bf16.mxu0 0
    %167 = vmatmul.mubr.bf16.gmra.mrb[0].mxu0 %v124
    %v168 = vpop.f32.mrb[0].mxu0
    %v169 = vadd.f32 0.0, %v168
    %v170 = vpop.f32.mrb[0].mxu0
    %v171 = vpop.f32.mrb[0].mxu0
    %v172 = vpop.f32.mrb[0].mxu0
    %173 = vdwg.mxu0
    %v174 = vadd.f32 %v57, %v161
    %v175 = vadd.f32 %v58, %v164
    %v176 = vadd.f32 %v59, %v169
    %177 = vst [vmem:[#allocation2] sm:$0xff] %v174
    %178 = vst [vmem:[#allocation2 + $0x8] sm:$0xff] %v175
    %179 = vst [vmem:[#allocation2 + $0x10] sm:$0xff] %v176
    // Predicated region
    $region34: #{tpu_custom_call.1} parent=1 // pred_check
      %p180 = pneg %p50
    $region35: #{tpu_custom_call.1} parent=1 // pred_check_branch
      %182 = sbr.rel (%p180) target = $region37
    $region36: #{tpu_custom_call.1} parent=1 // pred_region
      %v183 = vld [vmem:[#allocation2] sm:$0xff]
      %v184 = vld [vmem:[#allocation2 + $0x8] sm:$0xff]
      %v185 = vld [vmem:[#allocation2 + $0x10] sm:$0xff]
      %v186 = vld [vmem:[%s2] sm:$0x1]
      %v188 = vlaneseq
      %v189 = vshrl.u32 %v188, 7
      %v190 = vsub.s32 0, %v189
      %v191 = vrot.slane %v186, %v190
      %v193 = vadd.f32 %v183, %v191
      %v194 = vadd.f32 %v184, %v191
      %v195 = vadd.f32 %v185, %v191
      %196 = vst [vmem:[#allocation8] sm:$0xff] %v193
      %197 = vst [vmem:[#allocation8 + $0x8] sm:$0xff] %v194
      %198 = vst [vmem:[#allocation8 + $0x10] sm:$0xff] %v195
    $region37: #{tpu_custom_call.1} parent=1 // pred_fallthru
      _
    // Predicated region
    $region38: #{tpu_custom_call.1} parent=1 // pred_check
      _
    $region39: #{tpu_custom_call.1} parent=1 // pred_check_branch
      %200 = sbr.rel (0) target = $region41
    $region40: #{tpu_custom_call.1} parent=1 // pred_region
      %s202 = ssub.s32 384, 384
      %203 = vsyncadd [#allocation5], %s202
      %s204 = sshll.u32 [#allocation8], 4
      %s205 = int_to_ptr.vmem [resolvable:$true] %s204
      %210 = dma.vmem_to_hbm [thread:$0]  %s205, 384, %s5, [#allocation5], 128, 128, 8
    $region41: #{tpu_custom_call.1} parent=1 // pred_fallthru
      _
    // Predicated region
    $region42: #{tpu_custom_call.1} parent=1 // pred_check
      _
    $region43: #{tpu_custom_call.1} parent=1 // pred_check_branch
      %212 = sbr.rel (0) target = $region45
    $region44: #{tpu_custom_call.1} parent=1 // pred_region
      %213 = dma.done [#allocation5], 384
    $region45: #{tpu_custom_call.1} parent=1 // pred_fallthru
      _
    %214 = vsyncpa [#allocation4], 1
    %215 = vsyncpa [#allocation7], 1
    %216 = vsyncpa [#allocation5], 1

</llo_original>
